<compile_context>
chip_gen: v7x
topology: tpu7x:2x2x1
jax: 0.10.0
libtpu: 0.0.40
codegen_flags: <defaults>
</compile_context>

<pallas_src>
import functools

import jax
import jax.numpy as jnp
from jax.experimental import pallas as pl
from jax.experimental.pallas import tpu as pltpu


def _round_up(n, m):
    return -(-n // m) * m


def _cdiv(a, b):
    return -(-a // b)


def _tensorcores_per_chip():
    """Best-effort count of TensorCores that share a 'parallel' grid axis."""
    try:
        kind = jax.devices()[0].device_kind.lower()
    except Exception:
        return 1
    # v4 / v5p megacore and v7x expose 2 TensorCores per chip/device;
    # v5e / v6e (and older per-core devices) behave as a single TC.
    if "v5p" in kind or "v4" in kind or "7" in kind:
        return 2
    return 1


# --------------------------------------------------------------------------- #
# Kernel
# --------------------------------------------------------------------------- #
def _critic_kernel(x_ref, w_in_ref, b_in_ref, w_h_ref, b_h_ref,
                   w_out_ref, b_out_ref, o_ref, *, num_hidden_layer):
    # input layer + ReLU. x is f32 in HBM/VMEM; cast to bf16 here (a few VPU
    # pack ops, fully hidden under the MXU work).
    h = jnp.dot(x_ref[...].astype(jnp.bfloat16), w_in_ref[...],
                preferred_element_type=jnp.float32)
    h = jnp.maximum(h + b_in_ref[...], 0.0)       # (1, hidden) bias broadcast

    w_h = w_h_ref[...]
    b_h = b_h_ref[...]                            # (1, hidden) — NOT materialized to tile size

    def hidden_layer(h):
        hh = jnp.dot(h.astype(jnp.bfloat16), w_h,
                     preferred_element_type=jnp.float32)
        return jnp.maximum(hh + b_h, 0.0)

    if num_hidden_layer <= 3:
        for _ in range(num_hidden_layer):
            h = hidden_layer(h)
    else:
        # deep configs: keep the body compact but visible to the LLO scheduler
        h = jax.lax.fori_loop(0, num_hidden_layer,
                              lambda i, hh: hidden_layer(hh), h, unroll=True)

    # output layer (no activation). Block last dim == full array dim, so the
    # (tile, out_size) store is legal; masked-store cost is negligible here.
    out = jnp.dot(h.astype(jnp.bfloat16), w_out_ref[...],
                  preferred_element_type=jnp.float32)
    o_ref[...] = (out + b_out_ref[...]).astype(o_ref.dtype)


# --------------------------------------------------------------------------- #
# Wrapper
# --------------------------------------------------------------------------- #
def prepare_critic_params(params):
    """One-time (outside the hot path) cast: bf16 weights, f32 (1, n) biases."""
    w_in, b_in, w_h, b_h, w_out, b_out = params
    return (w_in.astype(jnp.bfloat16), b_in.astype(jnp.float32),
            w_h.astype(jnp.bfloat16), b_h.astype(jnp.float32),
            w_out.astype(jnp.bfloat16), b_out.astype(jnp.float32))


def _choose_tiling(B, batch_tile, n_tc):
    """Pick (tile, padded_batch, n_steps) with minimal padding; keep the grid
    even (>=2 steps) on dual-TensorCore chips so both TCs get equal work."""
    n_steps = max(1, _cdiv(B, batch_tile))
    if n_tc >= 2:
        if n_steps == 1 and B > 256:
            n_steps = 2
        elif n_steps > 1 and (n_steps % 2) != 0:
            n_steps += 1
    tile = _round_up(_cdiv(B, n_steps), 16)
    b_pad = n_steps * tile
    return tile, b_pad, n_steps


def critic_forward(x, prepared_params, *, num_hidden_layer=2, batch_tile=512):
    """x: (B, input_size) float32. prepared_params from prepare_critic_params.
    Returns (B, output_size) float32."""
    w_in, b_in, w_h, b_h, w_out, b_out = prepared_params
    B, in_size = x.shape
    hidden = w_in.shape[1]
    out_size = w_out.shape[1]

    tile, b_pad, n_steps = _choose_tiling(B, batch_tile, _tensorcores_per_chip())
    if b_pad != B:
        x = jnp.pad(x, ((0, b_pad - B), (0, 0)))

    kernel = functools.partial(_critic_kernel, num_hidden_layer=num_hidden_layer)

    out = pl.pallas_call(
        kernel,
        out_shape=jax.ShapeDtypeStruct((b_pad, out_size), jnp.float32),
        grid_spec=pltpu.PrefetchScalarGridSpec(
            num_scalar_prefetch=0,
            grid=(n_steps,),
            in_specs=[
                # activations: tiled over batch, f32 (cast to bf16 in-kernel)
                pl.BlockSpec((tile, in_size), lambda i: (i, 0)),
                # weights / biases: grid-invariant full blocks (no re-DMA)
                pl.BlockSpec((in_size, hidden), lambda i: (0, 0)),
                pl.BlockSpec((1, hidden), lambda i: (0, 0)),
                pl.BlockSpec((hidden, hidden), lambda i: (0, 0)),
                pl.BlockSpec((1, hidden), lambda i: (0, 0)),
                pl.BlockSpec((hidden, out_size), lambda i: (0, 0)),
                pl.BlockSpec((1, out_size), lambda i: (0, 0)),
            ],
            out_specs=pl.BlockSpec((tile, out_size), lambda i: (i, 0)),
        ),
        compiler_params=pltpu.CompilerParams(
            dimension_semantics=("parallel",)),
    )(x, w_in, b_in, w_h, b_h, w_out, b_out)

    return out[:B]


# --------------------------------------------------------------------------- #
# Init + reference
# --------------------------------------------------------------------------- #
def init_critic_params(key, input_size, output_size, hidden_size=128):
    """PyTorch nn.Linear-style init (uniform +-1/sqrt(fan_in)).
    Weights stored transposed: (in_features, out_features); biases (1, out)."""
    ks = jax.random.split(key, 6)

    def linear(kw, kb, fan_in, fan_out):
        bound = 1.0 / jnp.sqrt(fan_in)
        w = jax.random.uniform(kw, (fan_in, fan_out), jnp.float32, -bound, bound)
        b = jax.random.uniform(kb, (1, fan_out), jnp.float32, -bound, bound)
        return w, b

    w_in, b_in = linear(ks[0], ks[1], input_size, hidden_size)
    w_h, b_h = linear(ks[2], ks[3], hidden_size, hidden_size)
    w_out, b_out = linear(ks[4], ks[5], hidden_size, output_size)
    return (w_in, b_in, w_h, b_h, w_out, b_out)


def critic_reference(x, params, *, num_hidden_layer=2):
    """Pure-JAX reference mirroring the kernel numerics (bf16 matmuls, f32 acc)."""
    w_in, b_in, w_h, b_h, w_out, b_out = params
    bf = jnp.bfloat16
    h = jnp.dot(x.astype(bf), w_in.astype(bf), preferred_element_type=jnp.float32)
    h = jnp.maximum(h + b_in, 0.0)
    for _ in range(num_hidden_layer):
        h = jnp.dot(h.astype(bf), w_h.astype(bf), preferred_element_type=jnp.float32)
        h = jnp.maximum(h + b_h, 0.0)
    return jnp.dot(h.astype(bf), w_out.astype(bf),
                   preferred_element_type=jnp.float32) + b_out


if __name__ == "__main__":
    key = jax.random.PRNGKey(0)
    k_param, k_x1, k_x2 = jax.random.split(key, 3)

    input_size = 32
    output_size = 8
    hidden_size = 128
    num_hidden_layer = 2

    params = init_critic_params(k_param, input_size, output_size, hidden_size)
    prepared = prepare_critic_params(params)   # one-time bf16 cast, outside hot path

    # small batch (padded to 16 rows, single grid step)
    x_small = jax.random.normal(k_x1, (8, input_size), jnp.float32)
    out_small = jax.block_until_ready(
        critic_forward(x_small, prepared, num_hidden_layer=num_hidden_layer))
    ref_small = critic_reference(x_small, params, num_hidden_layer=num_hidden_layer)
    assert out_small.shape == (8, output_size)
    assert jnp.allclose(out_small, ref_small, atol=1e-3, rtol=1e-3), \
        "small-batch mismatch vs reference"

    # medium batch that previously triggered ~2x padding (272 rows); now the
    # tile is sized to the batch (single-TC) or split evenly across 2 TCs.
    x_med = jax.random.normal(k_x2, (272, input_size), jnp.float32)
    out_med = jax.block_until_ready(
        critic_forward(x_med, prepared, num_hidden_layer=num_hidden_layer))
    ref_med = critic_reference(x_med, params, num_hidden_layer=num_hidden_layer)
    assert out_med.shape == (272, output_size)
    assert jnp.allclose(out_med, ref_med, atol=1e-3, rtol=1e-3), \
        "medium-batch mismatch vs reference"

    print("KERNEL_OK")
</pallas_src>

<mosaic_0001>
module attributes {stable_mosaic.version = 11 : i64} {
  func.func @_critic_kernel(%arg0: i32, %arg1: memref<16x32xf32, #tpu.memory_space<vmem>>, %arg2: memref<32x128xbf16, #tpu.memory_space<vmem>>, %arg3: memref<1x128xf32, #tpu.memory_space<vmem>>, %arg4: memref<128x128xbf16, #tpu.memory_space<vmem>>, %arg5: memref<1x128xf32, #tpu.memory_space<vmem>>, %arg6: memref<128x8xbf16, #tpu.memory_space<vmem>>, %arg7: memref<1x8xf32, #tpu.memory_space<vmem>>, %arg8: memref<16x8xf32, #tpu.memory_space<vmem>>) attributes {dimension_semantics = [#tpu.dimension_semantics<parallel>], iteration_bounds = array<i64: 1>, scalar_prefetch = 0 : i64, scratch_operands = 0 : i64, tpu.core_type = #tpu.core_type<tc>, window_params = [{transform_indices = @transform_0, window_bounds = array<i64: 16, 32>}, {pipeline_mode = #tpu.pipeline_mode<synchronous>, transform_indices = @transform_1, window_bounds = array<i64: 32, 128>}, {pipeline_mode = #tpu.pipeline_mode<synchronous>, transform_indices = @transform_2, window_bounds = array<i64: 1, 128>}, {pipeline_mode = #tpu.pipeline_mode<synchronous>, transform_indices = @transform_3, window_bounds = array<i64: 128, 128>}, {pipeline_mode = #tpu.pipeline_mode<synchronous>, transform_indices = @transform_4, window_bounds = array<i64: 1, 128>}, {pipeline_mode = #tpu.pipeline_mode<synchronous>, transform_indices = @transform_5, window_bounds = array<i64: 128, 8>}, {pipeline_mode = #tpu.pipeline_mode<synchronous>, transform_indices = @transform_6, window_bounds = array<i64: 1, 8>}, {transform_indices = @transform_7, window_bounds = array<i64: 16, 8>}]} {
    %c0 = arith.constant 0 : index
    %c0_0 = arith.constant 0 : index
    %0 = vector.load %arg1[%c0, %c0_0] : memref<16x32xf32, #tpu.memory_space<vmem>>, vector<16x32xf32>
    %1 = arith.truncf %0 : vector<16x32xf32> to vector<16x32xbf16>
    %c0_1 = arith.constant 0 : index
    %c0_2 = arith.constant 0 : index
    %2 = vector.load %arg2[%c0_1, %c0_2] : memref<32x128xbf16, #tpu.memory_space<vmem>>, vector<32x128xbf16>
    %cst = arith.constant dense<0.000000e+00> : vector<16x128xf32>
    %3 = tpu.matmul %1, %2, %cst {dimension_numbers = #tpu.dot_dimension_numbers<[1], [0], [0], [1], [0, 0, 1, 1], [], []>} : vector<16x32xbf16>, vector<32x128xbf16>, vector<16x128xf32> -> vector<16x128xf32>
    %c0_3 = arith.constant 0 : index
    %c0_4 = arith.constant 0 : index
    %4 = vector.load %arg3[%c0_3, %c0_4] : memref<1x128xf32, #tpu.memory_space<vmem>>, vector<1x128xf32>
    %5 = vector.broadcast %4 : vector<1x128xf32> to vector<16x128xf32>
    %6 = arith.addf %3, %5 : vector<16x128xf32>
    %cst_5 = arith.constant 0.000000e+00 : f32
    %7 = vector.broadcast %cst_5 : f32 to vector<16x128xf32>
    %8 = arith.maximumf %6, %7 : vector<16x128xf32>
    %c0_6 = arith.constant 0 : index
    %c0_7 = arith.constant 0 : index
    %9 = vector.load %arg4[%c0_6, %c0_7] : memref<128x128xbf16, #tpu.memory_space<vmem>>, vector<128x128xbf16>
    %c0_8 = arith.constant 0 : index
    %c0_9 = arith.constant 0 : index
    %10 = vector.load %arg5[%c0_8, %c0_9] : memref<1x128xf32, #tpu.memory_space<vmem>>, vector<1x128xf32>
    %11 = arith.truncf %8 : vector<16x128xf32> to vector<16x128xbf16>
    %cst_10 = arith.constant dense<0.000000e+00> : vector<16x128xf32>
    %12 = tpu.matmul %11, %9, %cst_10 {dimension_numbers = #tpu.dot_dimension_numbers<[1], [0], [0], [1], [0, 0, 1, 1], [], []>} : vector<16x128xbf16>, vector<128x128xbf16>, vector<16x128xf32> -> vector<16x128xf32>
    %13 = vector.broadcast %10 : vector<1x128xf32> to vector<16x128xf32>
    %14 = arith.addf %12, %13 : vector<16x128xf32>
    %cst_11 = arith.constant 0.000000e+00 : f32
    %15 = vector.broadcast %cst_11 : f32 to vector<16x128xf32>
    %16 = arith.maximumf %14, %15 : vector<16x128xf32>
    %17 = arith.truncf %16 : vector<16x128xf32> to vector<16x128xbf16>
    %cst_12 = arith.constant dense<0.000000e+00> : vector<16x128xf32>
    %18 = tpu.matmul %17, %9, %cst_12 {dimension_numbers = #tpu.dot_dimension_numbers<[1], [0], [0], [1], [0, 0, 1, 1], [], []>} : vector<16x128xbf16>, vector<128x128xbf16>, vector<16x128xf32> -> vector<16x128xf32>
    %19 = vector.broadcast %10 : vector<1x128xf32> to vector<16x128xf32>
    %20 = arith.addf %18, %19 : vector<16x128xf32>
    %cst_13 = arith.constant 0.000000e+00 : f32
    %21 = vector.broadcast %cst_13 : f32 to vector<16x128xf32>
    %22 = arith.maximumf %20, %21 : vector<16x128xf32>
    %23 = arith.truncf %22 : vector<16x128xf32> to vector<16x128xbf16>
    %c0_14 = arith.constant 0 : index
    %c0_15 = arith.constant 0 : index
    %24 = vector.load %arg6[%c0_14, %c0_15] : memref<128x8xbf16, #tpu.memory_space<vmem>>, vector<128x8xbf16>
    %cst_16 = arith.constant dense<0.000000e+00> : vector<16x8xf32>
    %25 = tpu.matmul %23, %24, %cst_16 {dimension_numbers = #tpu.dot_dimension_numbers<[1], [0], [0], [1], [0, 0, 1, 1], [], []>} : vector<16x128xbf16>, vector<128x8xbf16>, vector<16x8xf32> -> vector<16x8xf32>
    %c0_17 = arith.constant 0 : index
    %c0_18 = arith.constant 0 : index
    %26 = vector.load %arg7[%c0_17, %c0_18] : memref<1x8xf32, #tpu.memory_space<vmem>>, vector<1x8xf32>
    %27 = vector.broadcast %26 : vector<1x8xf32> to vector<16x8xf32>
    %28 = arith.addf %25, %27 : vector<16x8xf32>
    %c0_19 = arith.constant 0 : index
    %c0_20 = arith.constant 0 : index
    %29 = vector.load %arg8[%c0_19, %c0_20] : memref<16x8xf32, #tpu.memory_space<vmem>>, vector<16x8xf32>
    tpu.vector_store %arg8[%c0_19, %c0_20], %28 {strides = array<i32>} : memref<16x8xf32, #tpu.memory_space<vmem>>, vector<16x8xf32>,
    return
  }
  func.func @transform_0(%arg0: i32) -> (i32, i32) {
    %c0_i32 = arith.constant 0 : i32
    %c0_i32_0 = arith.constant 0 : i32
    return %arg0, %c0_i32 : i32, i32
  }
  func.func @transform_1(%arg0: i32) -> (i32, i32) {
    %c0_i32 = arith.constant 0 : i32
    %c0_i32_0 = arith.constant 0 : i32
    %c0_i32_1 = arith.constant 0 : i32
    return %c0_i32, %c0_i32_0 : i32, i32
  }
  func.func @transform_2(%arg0: i32) -> (i32, i32) {
    %c0_i32 = arith.constant 0 : i32
    %c0_i32_0 = arith.constant 0 : i32
    %c0_i32_1 = arith.constant 0 : i32
    return %c0_i32, %c0_i32_0 : i32, i32
  }
  func.func @transform_3(%arg0: i32) -> (i32, i32) {
    %c0_i32 = arith.constant 0 : i32
    %c0_i32_0 = arith.constant 0 : i32
    %c0_i32_1 = arith.constant 0 : i32
    return %c0_i32, %c0_i32_0 : i32, i32
  }
  func.func @transform_4(%arg0: i32) -> (i32, i32) {
    %c0_i32 = arith.constant 0 : i32
    %c0_i32_0 = arith.constant 0 : i32
    %c0_i32_1 = arith.constant 0 : i32
    return %c0_i32, %c0_i32_0 : i32, i32
  }
  func.func @transform_5(%arg0: i32) -> (i32, i32) {
    %c0_i32 = arith.constant 0 : i32
    %c0_i32_0 = arith.constant 0 : i32
    %c0_i32_1 = arith.constant 0 : i32
    return %c0_i32, %c0_i32_0 : i32, i32
  }
  func.func @transform_6(%arg0: i32) -> (i32, i32) {
    %c0_i32 = arith.constant 0 : i32
    %c0_i32_0 = arith.constant 0 : i32
    %c0_i32_1 = arith.constant 0 : i32
    return %c0_i32, %c0_i32_0 : i32, i32
  }
  func.func @transform_7(%arg0: i32) -> (i32, i32) {
    %c0_i32 = arith.constant 0 : i32
    %c0_i32_0 = arith.constant 0 : i32
    return %arg0, %c0_i32 : i32, i32
  }
}

</mosaic_0001>

<llo_original>
// kernel: tpu_custom_call.1
$region0: #{tpu_custom_call.1}
  #allocation0 [shape = 'u32[]', space=smem, size = 0x4, offset = 0x4, fixed_abs, tag = 'smem constant byte address 0x4 - core index']
  #allocation1 [shape = 'u32[144,128]{1,0:T(1,128)}', space=vmem, size = 0x12000, scoped, tag = 'internal scratch']
  %s0 = inlined_call_operand.hbm [shape: f32[16,32], index: 0, kind: input, shape index: {}]
  %s1 = inlined_call_operand.hbm [shape: bf16[32,128], index: 1, kind: input, shape index: {}]
  %s2 = inlined_call_operand.vmem [shape: f32[1,128], index: 2, kind: input, shape index: {}]
  %s3 = inlined_call_operand.vmem [shape: bf16[128,128], index: 3, kind: input, shape index: {}]
  %s4 = inlined_call_operand.vmem [shape: f32[1,128], index: 4, kind: input, shape index: {}]
  %s5 = inlined_call_operand.vmem [shape: bf16[128,8], index: 5, kind: input, shape index: {}]
  %s6 = inlined_call_operand.vmem [shape: f32[1,8], index: 6, kind: input, shape index: {}]
  %s7 = inlined_call_operand.vmem [shape: f32[16,8], index: 7, kind: output, shape index: {}]
  %s8 = sld [smem:[#allocation0]]
  $region46: #{tpu_custom_call.1} parent=0
    _
  %s10 = ssub.s32 1, %s8
  %s11 = scalar_select 0, %s10, %s8
  $region1: #{tpu_custom_call.1} parent=0
    #allocation2 [shape = 'u8[8192]{0}', space=vmem, size = 0x2000, scoped, tag = 'input window, operand 0, single buffered']
    #allocation3 [shape = 's32[1]{0}', space=sflag, size = 0x4, scoped, tag = 'scoped memory for tpu_custom_call.1']
    #allocation4 [shape = 'u8[8192]{0}', space=vmem, size = 0x2000, scoped, tag = 'input window, operand 1, single buffered']
    #allocation5 [shape = 's32[1]{0}', space=sflag, size = 0x4, scoped, tag = 'scoped memory for tpu_custom_call.1']
    %12 = vsyncpa [#allocation3], 0
    %13 = vsyncpa [#allocation5], 0
    // Predicated region
    $region2: #{tpu_custom_call.1} parent=1 // pred_check
      _
    $region3: #{tpu_custom_call.1} parent=1 // pred_check_branch
      %15 = sbr.rel (0) target = $region5
    $region4: #{tpu_custom_call.1} parent=1 // pred_region
      %s17 = ssub.s32 256, 256
      %18 = vsyncadd [#allocation3], %s17
      %s19 = sshll.u32 [#allocation2], 4
      %s20 = int_to_ptr.vmem [resolvable:$true] %s19
      %25 = dma.hbm_to_vmem [thread:$0]  %s0, 256, %s20, [#allocation3], 128, 128, 8
    $region5: #{tpu_custom_call.1} parent=1 // pred_fallthru
      _
    // Predicated region
    $region6: #{tpu_custom_call.1} parent=1 // pred_check
      _
    $region7: #{tpu_custom_call.1} parent=1 // pred_check_branch
      %27 = sbr.rel (0) target = $region9
    $region8: #{tpu_custom_call.1} parent=1 // pred_region
      %s29 = ssub.s32 256, 256
      %30 = vsyncadd [#allocation5], %s29
      %s31 = sshll.u32 [#allocation4], 4
      %s32 = int_to_ptr.vmem [resolvable:$true] %s31
      %37 = dma.hbm_to_vmem [thread:$0]  %s1, 256, %s32, [#allocation5], 64, 64, 4
    $region9: #{tpu_custom_call.1} parent=1 // pred_fallthru
      _
    // Predicated region
    $region10: #{tpu_custom_call.1} parent=1 // pred_check
      _
    $region11: #{tpu_custom_call.1} parent=1 // pred_check_branch
      %39 = sbr.rel (0) target = $region13
    $region12: #{tpu_custom_call.1} parent=1 // pred_region
      _
    $region13: #{tpu_custom_call.1} parent=1 // pred_fallthru
      _
    // Predicated region
    $region14: #{tpu_custom_call.1} parent=1 // pred_check
      _
    $region15: #{tpu_custom_call.1} parent=1 // pred_check_branch
      %41 = sbr.rel (0) target = $region17
    $region16: #{tpu_custom_call.1} parent=1 // pred_region
      _
    $region17: #{tpu_custom_call.1} parent=1 // pred_fallthru
      _
    // Predicated region
    $region18: #{tpu_custom_call.1} parent=1 // pred_check
      _
    $region19: #{tpu_custom_call.1} parent=1 // pred_check_branch
      %43 = sbr.rel (0) target = $region21
    $region20: #{tpu_custom_call.1} parent=1 // pred_region
      _
    $region21: #{tpu_custom_call.1} parent=1 // pred_fallthru
      _
    // Predicated region
    $region22: #{tpu_custom_call.1} parent=1 // pred_check
      _
    $region23: #{tpu_custom_call.1} parent=1 // pred_check_branch
      %45 = sbr.rel (0) target = $region25
    $region24: #{tpu_custom_call.1} parent=1 // pred_region
      _
    $region25: #{tpu_custom_call.1} parent=1 // pred_fallthru
      _
    // Predicated region
    $region26: #{tpu_custom_call.1} parent=1 // pred_check
      _
    $region27: #{tpu_custom_call.1} parent=1 // pred_check_branch
      %47 = sbr.rel (0) target = $region29
    $region28: #{tpu_custom_call.1} parent=1 // pred_region
      _
    $region29: #{tpu_custom_call.1} parent=1 // pred_fallthru
      _
    // Predicated region
    $region30: #{tpu_custom_call.1} parent=1 // pred_check
      _
    $region31: #{tpu_custom_call.1} parent=1 // pred_check_branch
      %49 = sbr.rel (0) target = $region33
    $region32: #{tpu_custom_call.1} parent=1 // pred_region
      %50 = dma.done [#allocation3], 256
    $region33: #{tpu_custom_call.1} parent=1 // pred_fallthru
      _
    // Predicated region
    $region34: #{tpu_custom_call.1} parent=1 // pred_check
      _
    $region35: #{tpu_custom_call.1} parent=1 // pred_check_branch
      %52 = sbr.rel (0) target = $region37
    $region36: #{tpu_custom_call.1} parent=1 // pred_region
      %53 = dma.done [#allocation5], 256
    $region37: #{tpu_custom_call.1} parent=1 // pred_fallthru
      _
    %v55 = vld [vmem:[#allocation2] sm:$0xff]
    %v56 = vld [vmem:[#allocation2 + $0x8] sm:$0xff]
    %v57 = vpack.c.bf16 %v56, %v55
    %v58 = vld [vmem:[#allocation4] sm:$0xf]
    %v59 = vld [vmem:[#allocation4 + $0x4] sm:$0xf]
    %v60 = vld [vmem:[#allocation4 + $0x8] sm:$0xf]
    %v61 = vld [vmem:[#allocation4 + $0xc] sm:$0xf]
    %v62 = vld [vmem:[%s2] sm:$0x1]
    %v64 = vlaneseq
    %v65 = vshrl.u32 %v64, 7
    %v66 = vsub.s32 0, %v65
    %v67 = vrot.slane %v62, %v66
    %v73 = vunpack.c.l.b16 %v58
    %v74 = vunpack.c.l.b16 %v59
    %v75 = vunpack.c.l.b16 %v60
    %v76 = vunpack.c.l.b16 %v61
    %v77 = vpack.c.b16 %v74, %v73
    %v78 = vpack.c.b16 %v76, %v75
    %vm81 = vcmask 261120
    %v83 = vsel %vm81, %v57, 0
    %85 = vmatprep.subr.bf16.mxu0 0
    %86 = vmatpush1.bf16.msra.mxu0 %v77
    %87 = vmatprep.subr.bf16.mxu0 0
    %88 = vmatpush1.bf16.msra.mxu0 %v78
    %89 = vmatprep.subr.bf16.mxu0 0
    %90 = vmatpush1.bf16.msra.mxu0 0
    %91 = vmatprep.subr.bf16.mxu0 0
    %92 = vmatpush1.bf16.msra.mxu0 0
    %93 = vmatprep.subr.bf16.mxu0 0
    %94 = vmatpush1.bf16.msra.mxu0 0
    %95 = vmatprep.subr.bf16.mxu0 0
    %96 = vmatpush1.bf16.msra.mxu0 0
    %97 = vmatprep.subr.bf16.mxu0 0
    %98 = vmatpush1.bf16.msra.mxu0 0
    %99 = vmatprep.subr.bf16.mxu0 0
    %100 = vmatpush1.bf16.msra.mxu0 0
    %101 = vmatprep.subr.bf16.mxu0 0
    %102 = vmatpush1.bf16.msra.mxu0 0
    %103 = vmatprep.subr.bf16.mxu0 0
    %104 = vmatpush1.bf16.msra.mxu0 0
    %105 = vmatprep.subr.bf16.mxu0 0
    %106 = vmatpush1.bf16.msra.mxu0 0
    %107 = vmatprep.subr.bf16.mxu0 0
    %108 = vmatpush1.bf16.msra.mxu0 0
    %109 = vmatprep.subr.bf16.mxu0 0
    %110 = vmatpush1.bf16.msra.mxu0 0
    %111 = vmatprep.subr.bf16.mxu0 0
    %112 = vmatpush1.bf16.msra.mxu0 0
    %113 = vmatprep.subr.bf16.mxu0 0
    %114 = vmatpush1.bf16.msra.mxu0 0
    %115 = vmatprep.subr.bf16.mxu0 0
    %116 = vmatpush1.bf16.msra.mxu0 0
    %117 = vmatprep.mubr.bf16.mxu0 0
    %118 = vmatmul.mubr.bf16.gmra.mrb[0].mxu0 %v83
    %v119 = vpop.f32.mrb[0].mxu0
    %v120 = vadd.f32 %v67, %v119
    %v121 = vpop.f32.mrb[0].mxu0
    %v122 = vpop.f32.mrb[0].mxu0
    %v123 = vadd.f32 %v67, %v122
    %v124 = vpop.f32.mrb[0].mxu0
    %125 = vdwg.mxu0
    %v126 = vmax.f32 %v120, 0.0
    %v127 = vmax.f32 %v123, 0.0
    %v128 = vld [vmem:[%s3] sm:$0xf]
    %v129 = vld [vmem:[%s3 + $0x4] sm:$0xf]
    %v130 = vld [vmem:[%s3 + $0x8] sm:$0xf]
    %v131 = vld [vmem:[%s3 + $0xc] sm:$0xf]
    %v132 = vld [vmem:[%s3 + $0x10] sm:$0xf]
    %v133 = vld [vmem:[%s3 + $0x14] sm:$0xf]
    %v134 = vld [vmem:[%s3 + $0x18] sm:$0xf]
    %v135 = vld [vmem:[%s3 + $0x1c] sm:$0xf]
    %v136 = vld [vmem:[%s3 + $0x20] sm:$0xf]
    %v137 = vld [vmem:[%s3 + $0x24] sm:$0xf]
    %v138 = vld [vmem:[%s3 + $0x28] sm:$0xf]
    %v139 = vld [vmem:[%s3 + $0x2c] sm:$0xf]
    %v140 = vld [vmem:[%s3 + $0x30] sm:$0xf]
    %v141 = vld [vmem:[%s3 + $0x34] sm:$0xf]
    %v142 = vld [vmem:[%s3 + $0x38] sm:$0xf]
    %v143 = vld [vmem:[%s3 + $0x3c] sm:$0xf]
    %v144 = vld [vmem:[%s4] sm:$0x1]
    %v145 = vpack.c.bf16 %v127, %v126
    %v147 = vlaneseq
    %v148 = vshrl.u32 %v147, 7
    %v149 = vsub.s32 0, %v148
    %v150 = vrot.slane %v144, %v149
    %v168 = vunpack.c.l.b16 %v128
    %v169 = vunpack.c.l.b16 %v129
    %v170 = vunpack.c.l.b16 %v130
    %v171 = vunpack.c.l.b16 %v131
    %v172 = vunpack.c.l.b16 %v132
    %v173 = vunpack.c.l.b16 %v133
    %v174 = vunpack.c.l.b16 %v134
    %v175 = vunpack.c.l.b16 %v135
    %v176 = vunpack.c.l.b16 %v136
    %v177 = vunpack.c.l.b16 %v137
    %v178 = vunpack.c.l.b16 %v138
    %v179 = vunpack.c.l.b16 %v139
    %v180 = vunpack.c.l.b16 %v140
    %v181 = vunpack.c.l.b16 %v141
    %v182 = vunpack.c.l.b16 %v142
    %v183 = vunpack.c.l.b16 %v143
    %v184 = vpack.c.b16 %v169, %v168
    %v185 = vpack.c.b16 %v171, %v170
    %v186 = vpack.c.b16 %v173, %v172
    %v187 = vpack.c.b16 %v175, %v174
    %v188 = vpack.c.b16 %v177, %v176
    %v189 = vpack.c.b16 %v179, %v178
    %v190 = vpack.c.b16 %v181, %v180
    %v191 = vpack.c.b16 %v183, %v182
    %200 = vmatprep.subr.bf16.mxu0 0
    %201 = vmatpush1.bf16.msra.mxu0 %v184
    %202 = vmatprep.subr.bf16.mxu0 0
    %203 = vmatpush1.bf16.msra.mxu0 %v185
    %204 = vmatprep.subr.bf16.mxu0 0
    %205 = vmatpush1.bf16.msra.mxu0 %v186
    %206 = vmatprep.subr.bf16.mxu0 0
    %207 = vmatpush1.bf16.msra.mxu0 %v187
    %208 = vmatprep.subr.bf16.mxu0 0
    %209 = vmatpush1.bf16.msra.mxu0 %v188
    %210 = vmatprep.subr.bf16.mxu0 0
    %211 = vmatpush1.bf16.msra.mxu0 %v189
    %212 = vmatprep.subr.bf16.mxu0 0
    %213 = vmatpush1.bf16.msra.mxu0 %v190
    %214 = vmatprep.subr.bf16.mxu0 0
    %215 = vmatpush1.bf16.msra.mxu0 %v191
    %216 = vmatprep.subr.bf16.mxu0 0
    %217 = vmatpush1.bf16.msra.mxu0 0
    %218 = vmatprep.subr.bf16.mxu0 0
    %219 = vmatpush1.bf16.msra.mxu0 0
    %220 = vmatprep.subr.bf16.mxu0 0
    %221 = vmatpush1.bf16.msra.mxu0 0
    %222 = vmatprep.subr.bf16.mxu0 0
    %223 = vmatpush1.bf16.msra.mxu0 0
    %224 = vmatprep.subr.bf16.mxu0 0
    %225 = vmatpush1.bf16.msra.mxu0 0
    %226 = vmatprep.subr.bf16.mxu0 0
    %227 = vmatpush1.bf16.msra.mxu0 0
    %228 = vmatprep.subr.bf16.mxu0 0
    %229 = vmatpush1.bf16.msra.mxu0 0
    %230 = vmatprep.subr.bf16.mxu0 0
    %231 = vmatpush1.bf16.msra.mxu0 0
    %232 = vmatprep.mubr.bf16.mxu0 0
    %233 = vmatmul.mubr.bf16.gmra.mrb[0].mxu0 %v145
    %v234 = vpop.f32.mrb[0].mxu0
    %v235 = vadd.f32 %v150, %v234
    %v236 = vpop.f32.mrb[0].mxu0
    %v237 = vpop.f32.mrb[0].mxu0
    %v238 = vadd.f32 %v150, %v237
    %v239 = vpop.f32.mrb[0].mxu0
    %240 = vdwg.mxu0
    %v241 = vmax.f32 %v235, 0.0
    %v242 = vmax.f32 %v238, 0.0
    %v243 = vpack.c.bf16 %v242, %v241
    %244 = vmatprep.subr.bf16.mxu0 0
    %245 = vmatpush1.bf16.msra.mxu0 %v184
    %246 = vmatprep.subr.bf16.mxu0 0
    %247 = vmatpush1.bf16.msra.mxu0 %v185
    %248 = vmatprep.subr.bf16.mxu0 0
    %249 = vmatpush1.bf16.msra.mxu0 %v186
    %250 = vmatprep.subr.bf16.mxu0 0
    %251 = vmatpush1.bf16.msra.mxu0 %v187
    %252 = vmatprep.subr.bf16.mxu0 0
    %253 = vmatpush1.bf16.msra.mxu0 %v188
    %254 = vmatprep.subr.bf16.mxu0 0
    %255 = vmatpush1.bf16.msra.mxu0 %v189
    %256 = vmatprep.subr.bf16.mxu0 0
    %257 = vmatpush1.bf16.msra.mxu0 %v190
    %258 = vmatprep.subr.bf16.mxu0 0
    %259 = vmatpush1.bf16.msra.mxu0 %v191
    %260 = vmatprep.subr.bf16.mxu0 0
    %261 = vmatpush1.bf16.msra.mxu0 0
    %262 = vmatprep.subr.bf16.mxu0 0
    %263 = vmatpush1.bf16.msra.mxu0 0
    %264 = vmatprep.subr.bf16.mxu0 0
    %265 = vmatpush1.bf16.msra.mxu0 0
    %266 = vmatprep.subr.bf16.mxu0 0
    %267 = vmatpush1.bf16.msra.mxu0 0
    %268 = vmatprep.subr.bf16.mxu0 0
    %269 = vmatpush1.bf16.msra.mxu0 0
    %270 = vmatprep.subr.bf16.mxu0 0
    %271 = vmatpush1.bf16.msra.mxu0 0
    %272 = vmatprep.subr.bf16.mxu0 0
    %273 = vmatpush1.bf16.msra.mxu0 0
    %274 = vmatprep.subr.bf16.mxu0 0
    %275 = vmatpush1.bf16.msra.mxu0 0
    %276 = vmatprep.mubr.bf16.mxu0 0
    %277 = vmatmul.mubr.bf16.gmra.mrb[0].mxu0 %v243
    %v278 = vpop.f32.mrb[0].mxu0
    %v279 = vadd.f32 %v150, %v278
    %v280 = vpop.f32.mrb[0].mxu0
    %v281 = vpop.f32.mrb[0].mxu0
    %v282 = vadd.f32 %v150, %v281
    %v283 = vpop.f32.mrb[0].mxu0
    %284 = vdwg.mxu0
    %v285 = vmax.f32 %v279, 0.0
    %v286 = vmax.f32 %v282, 0.0
    %v287 = vpack.c.bf16 %v286, %v285
    %v288 = vld [vmem:[%s5] sm:$0xf]
    %v289 = vld [vmem:[%s5 + $0x4] sm:$0xf]
    %v290 = vld [vmem:[%s5 + $0x8] sm:$0xf]
    %v291 = vld [vmem:[%s5 + $0xc] sm:$0xf]
    %v292 = vld [vmem:[%s5 + $0x10] sm:$0xf]
    %v293 = vld [vmem:[%s5 + $0x14] sm:$0xf]
    %v294 = vld [vmem:[%s5 + $0x18] sm:$0xf]
    %v295 = vld [vmem:[%s5 + $0x1c] sm:$0xf]
    %v296 = vld [vmem:[%s5 + $0x20] sm:$0xf]
    %v297 = vld [vmem:[%s5 + $0x24] sm:$0xf]
    %v298 = vld [vmem:[%s5 + $0x28] sm:$0xf]
    %v299 = vld [vmem:[%s5 + $0x2c] sm:$0xf]
    %v300 = vld [vmem:[%s5 + $0x30] sm:$0xf]
    %v301 = vld [vmem:[%s5 + $0x34] sm:$0xf]
    %v302 = vld [vmem:[%s5 + $0x38] sm:$0xf]
    %v303 = vld [vmem:[%s5 + $0x3c] sm:$0xf]
    %v304 = vld [vmem:[%s6] sm:$0x1]
    %v306 = vlaneseq
    %v307 = vshrl.u32 %v306, 7
    %v308 = vsub.s32 0, %v307
    %v309 = vrot.slane %v304, %v308
    %v327 = vunpack.c.l.b16 %v288
    %v328 = vunpack.c.l.b16 %v289
    %v329 = vunpack.c.l.b16 %v290
    %v330 = vunpack.c.l.b16 %v291
    %v331 = vunpack.c.l.b16 %v292
    %v332 = vunpack.c.l.b16 %v293
    %v333 = vunpack.c.l.b16 %v294
    %v334 = vunpack.c.l.b16 %v295
    %v335 = vunpack.c.l.b16 %v296
    %v336 = vunpack.c.l.b16 %v297
    %v337 = vunpack.c.l.b16 %v298
    %v338 = vunpack.c.l.b16 %v299
    %v339 = vunpack.c.l.b16 %v300
    %v340 = vunpack.c.l.b16 %v301
    %v341 = vunpack.c.l.b16 %v302
    %v342 = vunpack.c.l.b16 %v303
    %v343 = vpack.c.b16 %v328, %v327
    %v344 = vpack.c.b16 %v330, %v329
    %v345 = vpack.c.b16 %v332, %v331
    %v346 = vpack.c.b16 %v334, %v333
    %v347 = vpack.c.b16 %v336, %v335
    %v348 = vpack.c.b16 %v338, %v337
    %v349 = vpack.c.b16 %v340, %v339
    %v350 = vpack.c.b16 %v342, %v341
    %359 = vmatprep.subr.bf16.mxu0 0
    %360 = vmatpush1.bf16.msra.mxu0 %v343
    %361 = vmatprep.subr.bf16.mxu0 0
    %362 = vmatpush1.bf16.msra.mxu0 %v344
    %363 = vmatprep.subr.bf16.mxu0 0
    %364 = vmatpush1.bf16.msra.mxu0 %v345
    %365 = vmatprep.subr.bf16.mxu0 0
    %366 = vmatpush1.bf16.msra.mxu0 %v346
    %367 = vmatprep.subr.bf16.mxu0 0
    %368 = vmatpush1.bf16.msra.mxu0 %v347
    %369 = vmatprep.subr.bf16.mxu0 0
    %370 = vmatpush1.bf16.msra.mxu0 %v348
    %371 = vmatprep.subr.bf16.mxu0 0
    %372 = vmatpush1.bf16.msra.mxu0 %v349
    %373 = vmatprep.subr.bf16.mxu0 0
    %374 = vmatpush1.bf16.msra.mxu0 %v350
    %375 = vmatprep.subr.bf16.mxu0 0
    %376 = vmatpush1.bf16.msra.mxu0 0
    %377 = vmatprep.subr.bf16.mxu0 0
    %378 = vmatpush1.bf16.msra.mxu0 0
    %379 = vmatprep.subr.bf16.mxu0 0
    %380 = vmatpush1.bf16.msra.mxu0 0
    %381 = vmatprep.subr.bf16.mxu0 0
    %382 = vmatpush1.bf16.msra.mxu0 0
    %383 = vmatprep.subr.bf16.mxu0 0
    %384 = vmatpush1.bf16.msra.mxu0 0
    %385 = vmatprep.subr.bf16.mxu0 0
    %386 = vmatpush1.bf16.msra.mxu0 0
    %387 = vmatprep.subr.bf16.mxu0 0
    %388 = vmatpush1.bf16.msra.mxu0 0
    %389 = vmatprep.subr.bf16.mxu0 0
    %390 = vmatpush1.bf16.msra.mxu0 0
    %391 = vmatprep.mubr.bf16.mxu0 0
    %392 = vmatmul.mubr.bf16.gmra.mrb[0].mxu0 %v287
    %v393 = vpop.f32.mrb[0].mxu0
    %v394 = vadd.f32 %v309, %v393
    %v395 = vpop.f32.mrb[0].mxu0
    %v396 = vpop.f32.mrb[0].mxu0
    %v397 = vadd.f32 %v309, %v396
    %v398 = vpop.f32.mrb[0].mxu0
    %399 = vdwg.mxu0
    %vm400 = vcmask 64512
    %401 = vst.msk [vmem:[%s7] sm:$0xff] %vm400, %v394
    %402 = vst.msk [vmem:[%s7 + $0x8] sm:$0xff] %vm400, %v397
    // Predicated region
    $region38: #{tpu_custom_call.1} parent=1 // pred_check
      _
    $region39: #{tpu_custom_call.1} parent=1 // pred_check_branch
      %404 = sbr.rel (0) target = $region41
    $region40: #{tpu_custom_call.1} parent=1 // pred_region
      _
    $region41: #{tpu_custom_call.1} parent=1 // pred_fallthru
      _
    // Predicated region
    $region42: #{tpu_custom_call.1} parent=1 // pred_check
      _
    $region43: #{tpu_custom_call.1} parent=1 // pred_check_branch
      %406 = sbr.rel (0) target = $region45
    $region44: #{tpu_custom_call.1} parent=1 // pred_region
      _
    $region45: #{tpu_custom_call.1} parent=1 // pred_fallthru
      _
    %407 = vsyncpa [#allocation3], 1
    %408 = vsyncpa [#allocation5], 1

</llo_original>
